<compile_context>
chip_gen: v7x
topology: tpu7x:2x2x1
jax: 0.10.0
libtpu: 0.0.40
codegen_flags: <defaults>
</compile_context>

<pallas_src>
import functools

import jax
import jax.numpy as jnp
from jax.experimental import pallas as pl
from jax.experimental.pallas import tpu as pltpu

BN_EPS = 1e-5
_SUBLANE = 8


# ----------------------------- helpers --------------------------------------


def _round_up(x, m):
    return ((x + m - 1) // m) * m


def _lane_pad(d):
    # v6e/v7x MXUs are 2x256^2: pad wide feature dims to 256; small dims keep
    # 128 (v5e's 4x128^2 is already matched by 128 and small dims stay small).
    return _round_up(d, 256) if d >= 256 else _round_up(d, 128)


def _pad2d(a, rows, cols):
    return jnp.pad(a, ((0, rows - a.shape[0]), (0, cols - a.shape[1])))


# Fully-resident, single-buffered VMEM block (no grid -> no pipelining).
_VMEM_SPEC = pl.BlockSpec(memory_space=pltpu.MemorySpace.VMEM)


# ----------------------------- kernels --------------------------------------


def _linear_kernel(x_ref, w_ref, b_ref, o_ref):
    """Plain linear layer: y = x @ W + b (W pre-transposed to (Din, Dout))."""
    o_ref[...] = (
        jnp.dot(x_ref[...], w_ref[...], preferred_element_type=jnp.float32)
        + b_ref[...]
    )


def _make_fused_mlp_kernel(num_layers, n_true, n_pad, h_p, dout_p):
    """One fused kernel for the full MLP (num_layers >= 2).

    Ref layout: (x_ref, w_0, ..., w_{num_layers-1}, vec_ref, o_ref)
      * x and all weights are bf16, weights pre-transposed to (Din_p, Dout_p).
      * vec_ref (f32) stacks [gamma_0, beta_0, gamma_1, beta_1, ..., b_last].
    """
    n_hidden = num_layers - 1
    inv_n = 1.0 / float(n_true)

    def kernel(*refs):
        vec_ref = refs[1 + num_layers]
        o_ref = refs[-1]

        if n_pad != n_true:
            row_mask = (
                jax.lax.broadcasted_iota(jnp.int32, (n_pad, 1), 0) < n_true
            )
        else:
            row_mask = None

        h = refs[0][...]                                  # bf16 (n_pad, din_p)
        for l in range(n_hidden):
            w = refs[1 + l][...]                          # bf16 (in_p, h_p)
            # MXU matmul in bf16, f32 accumulation.
            y = jnp.dot(h, w, preferred_element_type=jnp.float32)

            gamma = vec_ref[2 * l:2 * l + 1, 0:h_p]       # f32 (1, h_p)
            beta = vec_ref[2 * l + 1:2 * l + 2, 0:h_p]    # f32 (1, h_p)

            # BatchNorm1d, training-mode statistics (biased variance), f32.
            # Padded batch rows of h are zero, so sum(y)*inv_n is exact.
            mean = jnp.sum(y, axis=0, keepdims=True) * inv_n
            c = y - mean
            c2 = c * c
            if row_mask is not None:
                c2 = jnp.where(row_mask, c2, 0.0)
            var = jnp.sum(c2, axis=0, keepdims=True) * inv_n
            scale = gamma * jax.lax.rsqrt(var + BN_EPS)   # fold gamma into EUP rsqrt
            hf = jnp.maximum(c * scale + beta, 0.0)
            if row_mask is not None:
                hf = jnp.where(row_mask, hf, 0.0)
            h = hf.astype(jnp.bfloat16)

        w_last = refs[num_layers][...]                    # bf16 (h_p, dout_p)
        b_last = vec_ref[2 * n_hidden:2 * n_hidden + 1, 0:dout_p]
        o_ref[...] = (
            jnp.dot(h, w_last, preferred_element_type=jnp.float32) + b_last
        )

    return kernel


# ----------------------------- parameter prep (one-time) ---------------------


def prepare_mlp_params(params, num_layers, input_dim):
    """One-time prep: transpose weights to (Din, Dout), zero-pad to TPU tile
    multiples, cast matmul operands to bf16, stack the tiny per-feature
    vectors (gamma, beta, final bias) into one array.  Called ONCE, not per
    forward pass."""
    din_p = _lane_pad(input_dim)

    if num_layers == 1:
        w, b = params["linears"][0]
        output_dim = w.shape[0]
        dout_p = _lane_pad(output_dim)
        w_p = _pad2d(w.T, din_p, dout_p).astype(jnp.bfloat16)
        b_p = _pad2d(b.reshape(1, -1), 1, dout_p).astype(jnp.float32)
        return {"ws": (w_p,), "vecs": b_p}

    hidden_dim = params["linears"][0][0].shape[0]
    output_dim = params["linears"][num_layers - 1][0].shape[0]
    h_p = _lane_pad(hidden_dim)
    dout_p = _lane_pad(output_dim)
    vec_w = max(h_p, dout_p)

    ws = []
    for layer in range(num_layers - 1):
        w, _b_unused = params["linears"][layer]   # bias dropped (BN cancels it)
        in_p = din_p if layer == 0 else h_p
        ws.append(_pad2d(w.T, in_p, h_p).astype(jnp.bfloat16))
    w_last, b_last = params["linears"][num_layers - 1]
    ws.append(_pad2d(w_last.T, h_p, dout_p).astype(jnp.bfloat16))

    vec_rows = []
    for layer in range(num_layers - 1):
        vec_rows.append(_pad2d(params["bn_gamma"][layer].reshape(1, -1), 1, vec_w))
        vec_rows.append(_pad2d(params["bn_beta"][layer].reshape(1, -1), 1, vec_w))
    vec_rows.append(_pad2d(b_last.reshape(1, -1), 1, vec_w))
    vecs = jnp.concatenate(vec_rows, axis=0).astype(jnp.float32)

    return {"ws": tuple(ws), "vecs": vecs}


# ----------------------------- forward pass ----------------------------------


def mlp_forward(prepared, x, *, num_layers, output_dim):
    """Forward pass using pre-prepared (transposed/padded/bf16) parameters."""
    n, _ = x.shape
    n_pad = _round_up(n, _SUBLANE)
    din_p = prepared["ws"][0].shape[0]
    x_p = _pad2d(x, n_pad, din_p).astype(jnp.bfloat16)

    h_p = prepared["ws"][0].shape[1]
    dout_p = prepared["ws"][-1].shape[1]
    max_w = max(h_p, dout_p)

    # Explicit VMEM budget (single-buffered: no grid, no pipeline buffers).
    arg_bytes = x_p.size * x_p.dtype.itemsize
    for w in prepared["ws"]:
        arg_bytes += w.size * w.dtype.itemsize
    arg_bytes += prepared["vecs"].size * 4
    out_bytes = n_pad * dout_p * 4
    tmp_bytes = 6 * n_pad * max_w * 4            # y, c, c2, h (f32 + bf16) slack
    footprint = arg_bytes + out_bytes + tmp_bytes
    vmem_limit = min(max(int(1.5 * footprint) + (2 << 20), 16 << 20), 64 << 20)
    # TODO(synk): when footprint exceeds ~40 MiB (v7x has only 64 MiB physical
    # VMEM), switch to a per-layer K-tiled streaming pipeline with a two-pass
    # BatchNorm instead of this fully-resident fused kernel.
    compiler_params = pltpu.CompilerParams(vmem_limit_bytes=vmem_limit)

    if num_layers == 1:
        out = pl.pallas_call(
            _linear_kernel,
            out_shape=jax.ShapeDtypeStruct((n_pad, dout_p), jnp.float32),
            in_specs=[_VMEM_SPEC, _VMEM_SPEC, _VMEM_SPEC],
            out_specs=_VMEM_SPEC,
            compiler_params=compiler_params,
        )(x_p, prepared["ws"][0], prepared["vecs"])
        return out[:n, :output_dim]

    kernel = _make_fused_mlp_kernel(num_layers, n, n_pad, h_p, dout_p)
    out = pl.pallas_call(
        kernel,
        out_shape=jax.ShapeDtypeStruct((n_pad, dout_p), jnp.float32),
        in_specs=[_VMEM_SPEC] * (2 + num_layers),
        out_specs=_VMEM_SPEC,
        compiler_params=compiler_params,
    )(x_p, *prepared["ws"], prepared["vecs"])
    return out[:n, :output_dim]


# ----------------------------- reference (pure JAX, f32) ---------------------


def mlp_reference(params, x, num_layers):
    if num_layers == 1:
        w, b = params["linears"][0]
        return x @ w.T + b
    h = x
    for layer in range(num_layers - 1):
        w, b = params["linears"][layer]
        y = h @ w.T + b
        mean = jnp.mean(y, axis=0, keepdims=True)
        var = jnp.mean((y - mean) ** 2, axis=0, keepdims=True)
        y_hat = (y - mean) * jax.lax.rsqrt(var + BN_EPS)
        h = jnp.maximum(
            y_hat * params["bn_gamma"][layer] + params["bn_beta"][layer], 0.0)
    w, b = params["linears"][num_layers - 1]
    return h @ w.T + b


# ----------------------------- params init -----------------------------------


def init_mlp_params(key, num_layers, input_dim, hidden_dim, output_dim):
    """Synthetic init matching the PyTorch module's shapes.
    Linear: W, b ~ U(-1/sqrt(fan_in), 1/sqrt(fan_in)); BatchNorm: gamma=1, beta=0."""
    if num_layers < 1:
        raise ValueError("number of layers should be positive!")

    def linear_init(k, fan_in, fan_out):
        kw, kb = jax.random.split(k)
        bound = 1.0 / jnp.sqrt(jnp.float32(fan_in))
        w = jax.random.uniform(kw, (fan_out, fan_in), jnp.float32, -bound, bound)
        b = jax.random.uniform(kb, (fan_out,), jnp.float32, -bound, bound)
        return w, b

    params = {"linears": [], "bn_gamma": [], "bn_beta": []}
    if num_layers == 1:
        key, k = jax.random.split(key)
        params["linears"].append(linear_init(k, input_dim, output_dim))
        return params

    dims = [input_dim] + [hidden_dim] * (num_layers - 1) + [output_dim]
    for layer in range(num_layers):
        key, k = jax.random.split(key)
        params["linears"].append(linear_init(k, dims[layer], dims[layer + 1]))
    for _ in range(num_layers - 1):
        params["bn_gamma"].append(jnp.ones((hidden_dim,), jnp.float32))
        params["bn_beta"].append(jnp.zeros((hidden_dim,), jnp.float32))
    return params


# ----------------------------- main ------------------------------------------

if __name__ == "__main__":
    num_layers = 3
    batch = 8
    input_dim = 16
    hidden_dim = 32
    output_dim = 8

    key = jax.random.PRNGKey(0)
    key, kx = jax.random.split(key)
    x = jax.random.normal(kx, (batch, input_dim), jnp.float32)

    params = init_mlp_params(key, num_layers, input_dim, hidden_dim, output_dim)

    # One-time weight preparation (transpose + pad + bf16 + vector stacking),
    # hoisted out of the per-call forward pass.
    prepared = prepare_mlp_params(params, num_layers, input_dim)

    fwd = jax.jit(functools.partial(
        mlp_forward, num_layers=num_layers, output_dim=output_dim))
    out = fwd(prepared, x)
    out = jax.block_until_ready(out)

    assert out.shape == (batch, output_dim)
    assert bool(jnp.all(jnp.isfinite(out)))

    # bf16 MXU operands (intentional, per perf review) -> ~1e-2 relative error
    # vs the f32 reference; tolerance chosen accordingly.
    ref = mlp_reference(params, x, num_layers)
    assert bool(jnp.allclose(out, ref, rtol=3e-2, atol=3e-2)), (
        f"max abs diff = {float(jnp.max(jnp.abs(out - ref)))}"
    )

    print("KERNEL_OK")
</pallas_src>

<mosaic_0001>
module attributes {stable_mosaic.version = 11 : i64} {
  func.func @kernel(%arg0: memref<8x128xbf16, #tpu.memory_space<vmem>>, %arg1: memref<128x128xbf16, #tpu.memory_space<vmem>>, %arg2: memref<128x128xbf16, #tpu.memory_space<vmem>>, %arg3: memref<128x128xbf16, #tpu.memory_space<vmem>>, %arg4: memref<5x128xf32, #tpu.memory_space<vmem>>, %arg5: memref<8x128xf32, #tpu.memory_space<vmem>>) attributes {dimension_semantics = [], scalar_prefetch = 0 : i64, scratch_operands = 0 : i64, tpu.core_type = #tpu.core_type<tc>} {
    %c0 = arith.constant 0 : index
    %c0_0 = arith.constant 0 : index
    %0 = vector.load %arg0[%c0, %c0_0] : memref<8x128xbf16, #tpu.memory_space<vmem>>, vector<8x128xbf16>
    %c0_1 = arith.constant 0 : index
    %c0_2 = arith.constant 0 : index
    %1 = vector.load %arg1[%c0_1, %c0_2] : memref<128x128xbf16, #tpu.memory_space<vmem>>, vector<128x128xbf16>
    %cst = arith.constant dense<0.000000e+00> : vector<8x128xf32>
    %2 = tpu.matmul %0, %1, %cst {dimension_numbers = #tpu.dot_dimension_numbers<[1], [0], [0], [1], [0, 0, 1, 1], [], []>} : vector<8x128xbf16>, vector<128x128xbf16>, vector<8x128xf32> -> vector<8x128xf32>
    %c0_3 = arith.constant 0 : index
    %c0_4 = arith.constant 0 : index
    %3 = vector.load %arg4[%c0_3, %c0_4] : memref<5x128xf32, #tpu.memory_space<vmem>>, vector<1x128xf32>
    %c1 = arith.constant 1 : index
    %c0_5 = arith.constant 0 : index
    %4 = vector.load %arg4[%c1, %c0_5] : memref<5x128xf32, #tpu.memory_space<vmem>>, vector<1x128xf32>
    %cst_6 = arith.constant dense<0.000000e+00> : vector<128xf32>
    %5 = vector.multi_reduction <add>, %2, %cst_6 [0] : vector<8x128xf32> to vector<128xf32>
    %6 = vector.shape_cast %5 : vector<128xf32> to vector<1x128xf32>
    %cst_7 = arith.constant 1.250000e-01 : f32
    %7 = vector.broadcast %cst_7 : f32 to vector<1x128xf32>
    %8 = arith.mulf %6, %7 : vector<1x128xf32>
    %9 = vector.broadcast %8 : vector<1x128xf32> to vector<8x128xf32>
    %10 = arith.subf %2, %9 : vector<8x128xf32>
    %11 = arith.mulf %10, %10 : vector<8x128xf32>
    %cst_8 = arith.constant dense<0.000000e+00> : vector<128xf32>
    %12 = vector.multi_reduction <add>, %11, %cst_8 [0] : vector<8x128xf32> to vector<128xf32>
    %13 = vector.shape_cast %12 : vector<128xf32> to vector<1x128xf32>
    %cst_9 = arith.constant 1.250000e-01 : f32
    %14 = vector.broadcast %cst_9 : f32 to vector<1x128xf32>
    %15 = arith.mulf %13, %14 : vector<1x128xf32>
    %cst_10 = arith.constant 9.99999974E-6 : f32
    %16 = vector.broadcast %cst_10 : f32 to vector<1x128xf32>
    %17 = arith.addf %15, %16 : vector<1x128xf32>
    %18 = math.rsqrt %17 : vector<1x128xf32>
    %19 = arith.mulf %3, %18 : vector<1x128xf32>
    %20 = vector.broadcast %19 : vector<1x128xf32> to vector<8x128xf32>
    %21 = arith.mulf %10, %20 : vector<8x128xf32>
    %22 = vector.broadcast %4 : vector<1x128xf32> to vector<8x128xf32>
    %23 = arith.addf %21, %22 : vector<8x128xf32>
    %cst_11 = arith.constant 0.000000e+00 : f32
    %24 = vector.broadcast %cst_11 : f32 to vector<8x128xf32>
    %25 = arith.maximumf %23, %24 : vector<8x128xf32>
    %26 = arith.truncf %25 : vector<8x128xf32> to vector<8x128xbf16>
    %c0_12 = arith.constant 0 : index
    %c0_13 = arith.constant 0 : index
    %27 = vector.load %arg2[%c0_12, %c0_13] : memref<128x128xbf16, #tpu.memory_space<vmem>>, vector<128x128xbf16>
    %cst_14 = arith.constant dense<0.000000e+00> : vector<8x128xf32>
    %28 = tpu.matmul %26, %27, %cst_14 {dimension_numbers = #tpu.dot_dimension_numbers<[1], [0], [0], [1], [0, 0, 1, 1], [], []>} : vector<8x128xbf16>, vector<128x128xbf16>, vector<8x128xf32> -> vector<8x128xf32>
    %c2 = arith.constant 2 : index
    %c0_15 = arith.constant 0 : index
    %29 = vector.load %arg4[%c2, %c0_15] : memref<5x128xf32, #tpu.memory_space<vmem>>, vector<1x128xf32>
    %c3 = arith.constant 3 : index
    %c0_16 = arith.constant 0 : index
    %30 = vector.load %arg4[%c3, %c0_16] : memref<5x128xf32, #tpu.memory_space<vmem>>, vector<1x128xf32>
    %cst_17 = arith.constant dense<0.000000e+00> : vector<128xf32>
    %31 = vector.multi_reduction <add>, %28, %cst_17 [0] : vector<8x128xf32> to vector<128xf32>
    %32 = vector.shape_cast %31 : vector<128xf32> to vector<1x128xf32>
    %cst_18 = arith.constant 1.250000e-01 : f32
    %33 = vector.broadcast %cst_18 : f32 to vector<1x128xf32>
    %34 = arith.mulf %32, %33 : vector<1x128xf32>
    %35 = vector.broadcast %34 : vector<1x128xf32> to vector<8x128xf32>
    %36 = arith.subf %28, %35 : vector<8x128xf32>
    %37 = arith.mulf %36, %36 : vector<8x128xf32>
    %cst_19 = arith.constant dense<0.000000e+00> : vector<128xf32>
    %38 = vector.multi_reduction <add>, %37, %cst_19 [0] : vector<8x128xf32> to vector<128xf32>
    %39 = vector.shape_cast %38 : vector<128xf32> to vector<1x128xf32>
    %cst_20 = arith.constant 1.250000e-01 : f32
    %40 = vector.broadcast %cst_20 : f32 to vector<1x128xf32>
    %41 = arith.mulf %39, %40 : vector<1x128xf32>
    %cst_21 = arith.constant 9.99999974E-6 : f32
    %42 = vector.broadcast %cst_21 : f32 to vector<1x128xf32>
    %43 = arith.addf %41, %42 : vector<1x128xf32>
    %44 = math.rsqrt %43 : vector<1x128xf32>
    %45 = arith.mulf %29, %44 : vector<1x128xf32>
    %46 = vector.broadcast %45 : vector<1x128xf32> to vector<8x128xf32>
    %47 = arith.mulf %36, %46 : vector<8x128xf32>
    %48 = vector.broadcast %30 : vector<1x128xf32> to vector<8x128xf32>
    %49 = arith.addf %47, %48 : vector<8x128xf32>
    %cst_22 = arith.constant 0.000000e+00 : f32
    %50 = vector.broadcast %cst_22 : f32 to vector<8x128xf32>
    %51 = arith.maximumf %49, %50 : vector<8x128xf32>
    %52 = arith.truncf %51 : vector<8x128xf32> to vector<8x128xbf16>
    %c0_23 = arith.constant 0 : index
    %c0_24 = arith.constant 0 : index
    %53 = vector.load %arg3[%c0_23, %c0_24] : memref<128x128xbf16, #tpu.memory_space<vmem>>, vector<128x128xbf16>
    %c4 = arith.constant 4 : index
    %c0_25 = arith.constant 0 : index
    %54 = vector.load %arg4[%c4, %c0_25] : memref<5x128xf32, #tpu.memory_space<vmem>>, vector<1x128xf32>
    %cst_26 = arith.constant dense<0.000000e+00> : vector<8x128xf32>
    %55 = tpu.matmul %52, %53, %cst_26 {dimension_numbers = #tpu.dot_dimension_numbers<[1], [0], [0], [1], [0, 0, 1, 1], [], []>} : vector<8x128xbf16>, vector<128x128xbf16>, vector<8x128xf32> -> vector<8x128xf32>
    %56 = vector.broadcast %54 : vector<1x128xf32> to vector<8x128xf32>
    %57 = arith.addf %55, %56 : vector<8x128xf32>
    %c0_27 = arith.constant 0 : index
    %c0_28 = arith.constant 0 : index
    %58 = vector.load %arg5[%c0_27, %c0_28] : memref<8x128xf32, #tpu.memory_space<vmem>>, vector<8x128xf32>
    tpu.vector_store %arg5[%c0_27, %c0_28], %57 {strides = array<i32>} : memref<8x128xf32, #tpu.memory_space<vmem>>, vector<8x128xf32>,
    return
  }
}

</mosaic_0001>

<llo_original>
// kernel: mlp_forward.1
$region0: #{mlp_forward.1}
  #allocation0 [shape = 'u32[]', space=smem, size = 0x4, offset = 0x4, fixed_abs, tag = 'smem constant byte address 0x4 - core index']
  #allocation1 [shape = 'u32[144,128]{1,0:T(1,128)}', space=vmem, size = 0x12000, scoped, tag = 'internal scratch']
  %s0 = inlined_call_operand.vmem [shape: bf16[8,128], index: 0, kind: input, shape index: {}]
  %s1 = inlined_call_operand.hbm [shape: bf16[128,128], index: 1, kind: input, shape index: {}]
  %s2 = inlined_call_operand.hbm [shape: bf16[128,128], index: 2, kind: input, shape index: {}]
  %s3 = inlined_call_operand.hbm [shape: bf16[128,128], index: 3, kind: input, shape index: {}]
  %s4 = inlined_call_operand.vmem [shape: f32[5,128], index: 4, kind: input, shape index: {}]
  %s5 = inlined_call_operand.hbm [shape: f32[8,128], index: 5, kind: output, shape index: {}]
  %s6 = sld [smem:[#allocation0]]
  $region42: #{mlp_forward.1} parent=0
    _
  %s8 = ssub.s32 1, %s6
  %s9 = scalar_select 0, %s8, %s6
  $region1: #{mlp_forward.1} parent=0
    #allocation2 [shape = 'u8[32768]{0}', space=vmem, size = 0x8000, scoped, tag = 'input window, operand 1, single buffered']
    #allocation3 [shape = 's32[1]{0}', space=sflag, size = 0x4, scoped, tag = 'scoped memory for mlp_forward.1']
    #allocation4 [shape = 's32[1]{0}', space=sflag, size = 0x4, scoped, tag = 'scoped memory for mlp_forward.1']
    #allocation5 [shape = 'u8[32768]{0}', space=vmem, size = 0x8000, scoped, tag = 'input window, operand 2, single buffered']
    #allocation6 [shape = 's32[1]{0}', space=sflag, size = 0x4, scoped, tag = 'scoped memory for mlp_forward.1']
    #allocation7 [shape = 'u8[32768]{0}', space=vmem, size = 0x8000, scoped, tag = 'input window, operand 3, single buffered']
    #allocation8 [shape = 'u8[4096]{0}', space=vmem, size = 0x1000, scoped, tag = 'output window, operand 0, single buffered']
    %10 = vsyncpa [#allocation3], 0
    %11 = vsyncpa [#allocation6], 0
    %12 = vsyncpa [#allocation4], 0
    // Predicated region
    $region2: #{mlp_forward.1} parent=1 // pred_check
      _
    $region3: #{mlp_forward.1} parent=1 // pred_check_branch
      %14 = sbr.rel (0) target = $region5
    $region4: #{mlp_forward.1} parent=1 // pred_region
      _
    $region5: #{mlp_forward.1} parent=1 // pred_fallthru
      _
    // Predicated region
    $region6: #{mlp_forward.1} parent=1 // pred_check
      _
    $region7: #{mlp_forward.1} parent=1 // pred_check_branch
      %16 = sbr.rel (0) target = $region9
    $region8: #{mlp_forward.1} parent=1 // pred_region
      %s18 = ssub.s32 1024, 1024
      %19 = vsyncadd [#allocation3], %s18
      %s20 = sshll.u32 [#allocation2], 4
      %s21 = int_to_ptr.vmem [resolvable:$true] %s20
      %26 = dma.hbm_to_vmem [thread:$0]  %s1, 1024, %s21, [#allocation3], 64, 64, 4
    $region9: #{mlp_forward.1} parent=1 // pred_fallthru
      _
    // Predicated region
    $region10: #{mlp_forward.1} parent=1 // pred_check
      _
    $region11: #{mlp_forward.1} parent=1 // pred_check_branch
      %28 = sbr.rel (0) target = $region13
    $region12: #{mlp_forward.1} parent=1 // pred_region
      %s30 = ssub.s32 1024, 1024
      %31 = vsyncadd [#allocation6], %s30
      %s32 = sshll.u32 [#allocation5], 4
      %s33 = int_to_ptr.vmem [resolvable:$true] %s32
      %38 = dma.hbm_to_vmem [thread:$0]  %s2, 1024, %s33, [#allocation6], 64, 64, 4
    $region13: #{mlp_forward.1} parent=1 // pred_fallthru
      _
    // Predicated region
    $region14: #{mlp_forward.1} parent=1 // pred_check
      _
    $region15: #{mlp_forward.1} parent=1 // pred_check_branch
      %40 = sbr.rel (0) target = $region17
    $region16: #{mlp_forward.1} parent=1 // pred_region
      %s42 = ssub.s32 1024, 1024
      %43 = vsyncadd [#allocation6], %s42
      %s44 = sshll.u32 [#allocation7], 4
      %s45 = int_to_ptr.vmem [resolvable:$true] %s44
      %50 = dma.hbm_to_vmem [thread:$0]  %s3, 1024, %s45, [#allocation6], 64, 64, 4
    $region17: #{mlp_forward.1} parent=1 // pred_fallthru
      _
    // Predicated region
    $region18: #{mlp_forward.1} parent=1 // pred_check
      _
    $region19: #{mlp_forward.1} parent=1 // pred_check_branch
      %52 = sbr.rel (0) target = $region21
    $region20: #{mlp_forward.1} parent=1 // pred_region
      _
    $region21: #{mlp_forward.1} parent=1 // pred_fallthru
      _
    // Predicated region
    $region22: #{mlp_forward.1} parent=1 // pred_check
      _
    $region23: #{mlp_forward.1} parent=1 // pred_check_branch
      %54 = sbr.rel (0) target = $region25
    $region24: #{mlp_forward.1} parent=1 // pred_region
      %55 = dma.done [#allocation3], 1024
    $region25: #{mlp_forward.1} parent=1 // pred_fallthru
      _
    // Predicated region
    $region26: #{mlp_forward.1} parent=1 // pred_check
      _
    $region27: #{mlp_forward.1} parent=1 // pred_check_branch
      %57 = sbr.rel (0) target = $region29
    $region28: #{mlp_forward.1} parent=1 // pred_region
      %58 = dma.done [#allocation6], 1024
    $region29: #{mlp_forward.1} parent=1 // pred_fallthru
      _
    // Predicated region
    $region30: #{mlp_forward.1} parent=1 // pred_check
      _
    $region31: #{mlp_forward.1} parent=1 // pred_check_branch
      %60 = sbr.rel (0) target = $region33
    $region32: #{mlp_forward.1} parent=1 // pred_region
      %61 = dma.done [#allocation6], 1024
    $region33: #{mlp_forward.1} parent=1 // pred_fallthru
      _
    %v63 = vld [vmem:[%s0] sm:$0xf]
    %v64 = vld [vmem:[#allocation2] sm:$0xf]
    %v65 = vld [vmem:[#allocation2 + $0x4] sm:$0xf]
    %v66 = vld [vmem:[#allocation2 + $0x8] sm:$0xf]
    %v67 = vld [vmem:[#allocation2 + $0xc] sm:$0xf]
    %v68 = vld [vmem:[#allocation2 + $0x10] sm:$0xf]
    %v69 = vld [vmem:[#allocation2 + $0x14] sm:$0xf]
    %v70 = vld [vmem:[#allocation2 + $0x18] sm:$0xf]
    %v71 = vld [vmem:[#allocation2 + $0x1c] sm:$0xf]
    %v72 = vld [vmem:[#allocation2 + $0x20] sm:$0xf]
    %v73 = vld [vmem:[#allocation2 + $0x24] sm:$0xf]
    %v74 = vld [vmem:[#allocation2 + $0x28] sm:$0xf]
    %v75 = vld [vmem:[#allocation2 + $0x2c] sm:$0xf]
    %v76 = vld [vmem:[#allocation2 + $0x30] sm:$0xf]
    %v77 = vld [vmem:[#allocation2 + $0x34] sm:$0xf]
    %v78 = vld [vmem:[#allocation2 + $0x38] sm:$0xf]
    %v79 = vld [vmem:[#allocation2 + $0x3c] sm:$0xf]
    %v96 = vunpack.c.l.b16 %v64
    %v97 = vunpack.c.l.b16 %v65
    %v98 = vunpack.c.l.b16 %v66
    %v99 = vunpack.c.l.b16 %v67
    %v100 = vunpack.c.l.b16 %v68
    %v101 = vunpack.c.l.b16 %v69
    %v102 = vunpack.c.l.b16 %v70
    %v103 = vunpack.c.l.b16 %v71
    %v104 = vunpack.c.l.b16 %v72
    %v105 = vunpack.c.l.b16 %v73
    %v106 = vunpack.c.l.b16 %v74
    %v107 = vunpack.c.l.b16 %v75
    %v108 = vunpack.c.l.b16 %v76
    %v109 = vunpack.c.l.b16 %v77
    %v110 = vunpack.c.l.b16 %v78
    %v111 = vunpack.c.l.b16 %v79
    %v112 = vpack.c.b16 %v97, %v96
    %v113 = vpack.c.b16 %v99, %v98
    %v114 = vpack.c.b16 %v101, %v100
    %v115 = vpack.c.b16 %v103, %v102
    %v116 = vpack.c.b16 %v105, %v104
    %v117 = vpack.c.b16 %v107, %v106
    %v118 = vpack.c.b16 %v109, %v108
    %v119 = vpack.c.b16 %v111, %v110
    %128 = vmatprep.subr.bf16.mxu0 0
    %129 = vmatpush1.bf16.msra.mxu0 %v112
    %130 = vmatprep.subr.bf16.mxu0 0
    %131 = vmatpush1.bf16.msra.mxu0 %v113
    %132 = vmatprep.subr.bf16.mxu0 0
    %133 = vmatpush1.bf16.msra.mxu0 %v114
    %134 = vmatprep.subr.bf16.mxu0 0
    %135 = vmatpush1.bf16.msra.mxu0 %v115
    %136 = vmatprep.subr.bf16.mxu0 0
    %137 = vmatpush1.bf16.msra.mxu0 %v116
    %138 = vmatprep.subr.bf16.mxu0 0
    %139 = vmatpush1.bf16.msra.mxu0 %v117
    %140 = vmatprep.subr.bf16.mxu0 0
    %141 = vmatpush1.bf16.msra.mxu0 %v118
    %142 = vmatprep.subr.bf16.mxu0 0
    %143 = vmatpush1.bf16.msra.mxu0 %v119
    %144 = vmatprep.subr.bf16.mxu0 0
    %145 = vmatpush1.bf16.msra.mxu0 0
    %146 = vmatprep.subr.bf16.mxu0 0
    %147 = vmatpush1.bf16.msra.mxu0 0
    %148 = vmatprep.subr.bf16.mxu0 0
    %149 = vmatpush1.bf16.msra.mxu0 0
    %150 = vmatprep.subr.bf16.mxu0 0
    %151 = vmatpush1.bf16.msra.mxu0 0
    %152 = vmatprep.subr.bf16.mxu0 0
    %153 = vmatpush1.bf16.msra.mxu0 0
    %154 = vmatprep.subr.bf16.mxu0 0
    %155 = vmatpush1.bf16.msra.mxu0 0
    %156 = vmatprep.subr.bf16.mxu0 0
    %157 = vmatpush1.bf16.msra.mxu0 0
    %158 = vmatprep.subr.bf16.mxu0 0
    %159 = vmatpush1.bf16.msra.mxu0 0
    %160 = vmatprep.mubr.bf16.mxu0 0
    %161 = vmatmul.mubr.bf16.gmra.mrb[0].mxu0 %v63
    %v162 = vpop.f32.mrb[0].mxu0
    %v163 = vadd.f32 0.0, %v162
    %v164 = vpop.f32.mrb[0].mxu0
    %v165 = vpop.f32.mrb[0].mxu0
    %v166 = vpop.f32.mrb[0].mxu0
    %167 = vdwg.mxu0
    %v168 = vld [vmem:[%s4] sm:$0x1]
    %v169 = vld [vmem:[%s4 + $0x1] sm:$0x1]
    %v170 = vrot.slane %v163, 4
    %v171 = vadd.f32 %v163, %v170
    %v172 = vrot.slane %v171, 2
    %v173 = vadd.f32 %v171, %v172
    %v174 = vrot.slane %v173, 1
    %v175 = vadd.f32 %v173, %v174
    %v176 = vmul.f32 %v175, 0.125
    %v177 = vsub.f32 %v163, %v176
    %v178 = vmul.f32 %v177, %v177
    %v179 = vrot.slane %v178, 4
    %v180 = vadd.f32 %v178, %v179
    %v181 = vrot.slane %v180, 2
    %v182 = vadd.f32 %v180, %v181
    %v183 = vrot.slane %v182, 1
    %v184 = vadd.f32 %v182, %v183
    %v185 = vmul.f32 %v184, 0.125
    %v186 = vadd.f32 %v185, 1e-05
    %v187 = vrsqrt.pop %v186
    %v188 = vmul.f32 %v168, %v187
    %v189 = vlaneseq
    %v190 = vshrl.u32 %v189, 7
    %v191 = vsub.s32 0, %v190
    %v192 = vrot.slane %v188, %v191
    %v193 = vmul.f32 %v177, %v192
    %v194 = vlaneseq
    %v195 = vshrl.u32 %v194, 7
    %v196 = vsub.s32 0, %v195
    %v197 = vrot.slane %v169, %v196
    %v198 = vadd.f32 %v193, %v197
    %v199 = vmax.f32 %v198, 0.0
    %v200 = vpack.c.bf16 %v199, %v199
    %v201 = vld [vmem:[#allocation5] sm:$0xf]
    %v202 = vld [vmem:[#allocation5 + $0x4] sm:$0xf]
    %v203 = vld [vmem:[#allocation5 + $0x8] sm:$0xf]
    %v204 = vld [vmem:[#allocation5 + $0xc] sm:$0xf]
    %v205 = vld [vmem:[#allocation5 + $0x10] sm:$0xf]
    %v206 = vld [vmem:[#allocation5 + $0x14] sm:$0xf]
    %v207 = vld [vmem:[#allocation5 + $0x18] sm:$0xf]
    %v208 = vld [vmem:[#allocation5 + $0x1c] sm:$0xf]
    %v209 = vld [vmem:[#allocation5 + $0x20] sm:$0xf]
    %v210 = vld [vmem:[#allocation5 + $0x24] sm:$0xf]
    %v211 = vld [vmem:[#allocation5 + $0x28] sm:$0xf]
    %v212 = vld [vmem:[#allocation5 + $0x2c] sm:$0xf]
    %v213 = vld [vmem:[#allocation5 + $0x30] sm:$0xf]
    %v214 = vld [vmem:[#allocation5 + $0x34] sm:$0xf]
    %v215 = vld [vmem:[#allocation5 + $0x38] sm:$0xf]
    %v216 = vld [vmem:[#allocation5 + $0x3c] sm:$0xf]
    %v233 = vunpack.c.l.b16 %v201
    %v234 = vunpack.c.l.b16 %v202
    %v235 = vunpack.c.l.b16 %v203
    %v236 = vunpack.c.l.b16 %v204
    %v237 = vunpack.c.l.b16 %v205
    %v238 = vunpack.c.l.b16 %v206
    %v239 = vunpack.c.l.b16 %v207
    %v240 = vunpack.c.l.b16 %v208
    %v241 = vunpack.c.l.b16 %v209
    %v242 = vunpack.c.l.b16 %v210
    %v243 = vunpack.c.l.b16 %v211
    %v244 = vunpack.c.l.b16 %v212
    %v245 = vunpack.c.l.b16 %v213
    %v246 = vunpack.c.l.b16 %v214
    %v247 = vunpack.c.l.b16 %v215
    %v248 = vunpack.c.l.b16 %v216
    %v249 = vpack.c.b16 %v234, %v233
    %v250 = vpack.c.b16 %v236, %v235
    %v251 = vpack.c.b16 %v238, %v237
    %v252 = vpack.c.b16 %v240, %v239
    %v253 = vpack.c.b16 %v242, %v241
    %v254 = vpack.c.b16 %v244, %v243
    %v255 = vpack.c.b16 %v246, %v245
    %v256 = vpack.c.b16 %v248, %v247
    %265 = vmatprep.subr.bf16.mxu0 0
    %266 = vmatpush1.bf16.msra.mxu0 %v249
    %267 = vmatprep.subr.bf16.mxu0 0
    %268 = vmatpush1.bf16.msra.mxu0 %v250
    %269 = vmatprep.subr.bf16.mxu0 0
    %270 = vmatpush1.bf16.msra.mxu0 %v251
    %271 = vmatprep.subr.bf16.mxu0 0
    %272 = vmatpush1.bf16.msra.mxu0 %v252
    %273 = vmatprep.subr.bf16.mxu0 0
    %274 = vmatpush1.bf16.msra.mxu0 %v253
    %275 = vmatprep.subr.bf16.mxu0 0
    %276 = vmatpush1.bf16.msra.mxu0 %v254
    %277 = vmatprep.subr.bf16.mxu0 0
    %278 = vmatpush1.bf16.msra.mxu0 %v255
    %279 = vmatprep.subr.bf16.mxu0 0
    %280 = vmatpush1.bf16.msra.mxu0 %v256
    %281 = vmatprep.subr.bf16.mxu0 0
    %282 = vmatpush1.bf16.msra.mxu0 0
    %283 = vmatprep.subr.bf16.mxu0 0
    %284 = vmatpush1.bf16.msra.mxu0 0
    %285 = vmatprep.subr.bf16.mxu0 0
    %286 = vmatpush1.bf16.msra.mxu0 0
    %287 = vmatprep.subr.bf16.mxu0 0
    %288 = vmatpush1.bf16.msra.mxu0 0
    %289 = vmatprep.subr.bf16.mxu0 0
    %290 = vmatpush1.bf16.msra.mxu0 0
    %291 = vmatprep.subr.bf16.mxu0 0
    %292 = vmatpush1.bf16.msra.mxu0 0
    %293 = vmatprep.subr.bf16.mxu0 0
    %294 = vmatpush1.bf16.msra.mxu0 0
    %295 = vmatprep.subr.bf16.mxu0 0
    %296 = vmatpush1.bf16.msra.mxu0 0
    %297 = vmatprep.mubr.bf16.mxu0 0
    %298 = vmatmul.mubr.bf16.gmra.mrb[0].mxu0 %v200
    %v299 = vpop.f32.mrb[0].mxu0
    %v300 = vadd.f32 0.0, %v299
    %v301 = vpop.f32.mrb[0].mxu0
    %v302 = vpop.f32.mrb[0].mxu0
    %v303 = vpop.f32.mrb[0].mxu0
    %304 = vdwg.mxu0
    %v305 = vld [vmem:[%s4 + $0x2] sm:$0x1]
    %v306 = vld [vmem:[%s4 + $0x3] sm:$0x1]
    %v307 = vrot.slane %v300, 4
    %v308 = vadd.f32 %v300, %v307
    %v309 = vrot.slane %v308, 2
    %v310 = vadd.f32 %v308, %v309
    %v311 = vrot.slane %v310, 1
    %v312 = vadd.f32 %v310, %v311
    %v313 = vmul.f32 %v312, 0.125
    %v314 = vsub.f32 %v300, %v313
    %v315 = vmul.f32 %v314, %v314
    %v316 = vrot.slane %v315, 4
    %v317 = vadd.f32 %v315, %v316
    %v318 = vrot.slane %v317, 2
    %v319 = vadd.f32 %v317, %v318
    %v320 = vrot.slane %v319, 1
    %v321 = vadd.f32 %v319, %v320
    %v322 = vmul.f32 %v321, 0.125
    %v323 = vadd.f32 %v322, 1e-05
    %v324 = vrsqrt.pop %v323
    %v325 = vmul.f32 %v305, %v324
    %v326 = vlaneseq
    %v327 = vshrl.u32 %v326, 7
    %v328 = vsub.s32 0, %v327
    %v329 = vrot.slane %v325, %v328
    %v330 = vmul.f32 %v314, %v329
    %v331 = vlaneseq
    %v332 = vshrl.u32 %v331, 7
    %v333 = vsub.s32 0, %v332
    %v334 = vrot.slane %v306, %v333
    %v335 = vadd.f32 %v330, %v334
    %v336 = vmax.f32 %v335, 0.0
    %v337 = vpack.c.bf16 %v336, %v336
    %v338 = vld [vmem:[#allocation7] sm:$0xf]
    %v339 = vld [vmem:[#allocation7 + $0x4] sm:$0xf]
    %v340 = vld [vmem:[#allocation7 + $0x8] sm:$0xf]
    %v341 = vld [vmem:[#allocation7 + $0xc] sm:$0xf]
    %v342 = vld [vmem:[#allocation7 + $0x10] sm:$0xf]
    %v343 = vld [vmem:[#allocation7 + $0x14] sm:$0xf]
    %v344 = vld [vmem:[#allocation7 + $0x18] sm:$0xf]
    %v345 = vld [vmem:[#allocation7 + $0x1c] sm:$0xf]
    %v346 = vld [vmem:[#allocation7 + $0x20] sm:$0xf]
    %v347 = vld [vmem:[#allocation7 + $0x24] sm:$0xf]
    %v348 = vld [vmem:[#allocation7 + $0x28] sm:$0xf]
    %v349 = vld [vmem:[#allocation7 + $0x2c] sm:$0xf]
    %v350 = vld [vmem:[#allocation7 + $0x30] sm:$0xf]
    %v351 = vld [vmem:[#allocation7 + $0x34] sm:$0xf]
    %v352 = vld [vmem:[#allocation7 + $0x38] sm:$0xf]
    %v353 = vld [vmem:[#allocation7 + $0x3c] sm:$0xf]
    %v354 = vld [vmem:[%s4 + $0x4] sm:$0x1]
    %v355 = vlaneseq
    %v356 = vshrl.u32 %v355, 7
    %v357 = vsub.s32 0, %v356
    %v358 = vrot.slane %v354, %v357
    %v375 = vunpack.c.l.b16 %v338
    %v376 = vunpack.c.l.b16 %v339
    %v377 = vunpack.c.l.b16 %v340
    %v378 = vunpack.c.l.b16 %v341
    %v379 = vunpack.c.l.b16 %v342
    %v380 = vunpack.c.l.b16 %v343
    %v381 = vunpack.c.l.b16 %v344
    %v382 = vunpack.c.l.b16 %v345
    %v383 = vunpack.c.l.b16 %v346
    %v384 = vunpack.c.l.b16 %v347
    %v385 = vunpack.c.l.b16 %v348
    %v386 = vunpack.c.l.b16 %v349
    %v387 = vunpack.c.l.b16 %v350
    %v388 = vunpack.c.l.b16 %v351
    %v389 = vunpack.c.l.b16 %v352
    %v390 = vunpack.c.l.b16 %v353
    %v391 = vpack.c.b16 %v376, %v375
    %v392 = vpack.c.b16 %v378, %v377
    %v393 = vpack.c.b16 %v380, %v379
    %v394 = vpack.c.b16 %v382, %v381
    %v395 = vpack.c.b16 %v384, %v383
    %v396 = vpack.c.b16 %v386, %v385
    %v397 = vpack.c.b16 %v388, %v387
    %v398 = vpack.c.b16 %v390, %v389
    %407 = vmatprep.subr.bf16.mxu0 0
    %408 = vmatpush1.bf16.msra.mxu0 %v391
    %409 = vmatprep.subr.bf16.mxu0 0
    %410 = vmatpush1.bf16.msra.mxu0 %v392
    %411 = vmatprep.subr.bf16.mxu0 0
    %412 = vmatpush1.bf16.msra.mxu0 %v393
    %413 = vmatprep.subr.bf16.mxu0 0
    %414 = vmatpush1.bf16.msra.mxu0 %v394
    %415 = vmatprep.subr.bf16.mxu0 0
    %416 = vmatpush1.bf16.msra.mxu0 %v395
    %417 = vmatprep.subr.bf16.mxu0 0
    %418 = vmatpush1.bf16.msra.mxu0 %v396
    %419 = vmatprep.subr.bf16.mxu0 0
    %420 = vmatpush1.bf16.msra.mxu0 %v397
    %421 = vmatprep.subr.bf16.mxu0 0
    %422 = vmatpush1.bf16.msra.mxu0 %v398
    %423 = vmatprep.subr.bf16.mxu0 0
    %424 = vmatpush1.bf16.msra.mxu0 0
    %425 = vmatprep.subr.bf16.mxu0 0
    %426 = vmatpush1.bf16.msra.mxu0 0
    %427 = vmatprep.subr.bf16.mxu0 0
    %428 = vmatpush1.bf16.msra.mxu0 0
    %429 = vmatprep.subr.bf16.mxu0 0
    %430 = vmatpush1.bf16.msra.mxu0 0
    %431 = vmatprep.subr.bf16.mxu0 0
    %432 = vmatpush1.bf16.msra.mxu0 0
    %433 = vmatprep.subr.bf16.mxu0 0
    %434 = vmatpush1.bf16.msra.mxu0 0
    %435 = vmatprep.subr.bf16.mxu0 0
    %436 = vmatpush1.bf16.msra.mxu0 0
    %437 = vmatprep.subr.bf16.mxu0 0
    %438 = vmatpush1.bf16.msra.mxu0 0
    %439 = vmatprep.mubr.bf16.mxu0 0
    %440 = vmatmul.mubr.bf16.gmra.mrb[0].mxu0 %v337
    %v441 = vpop.f32.mrb[0].mxu0
    %v442 = vadd.f32 %v358, %v441
    %v443 = vpop.f32.mrb[0].mxu0
    %v444 = vpop.f32.mrb[0].mxu0
    %v445 = vpop.f32.mrb[0].mxu0
    %446 = vdwg.mxu0
    %447 = vst [vmem:[#allocation8] sm:$0xff] %v442
    // Predicated region
    $region34: #{mlp_forward.1} parent=1 // pred_check
      _
    $region35: #{mlp_forward.1} parent=1 // pred_check_branch
      %449 = sbr.rel (0) target = $region37
    $region36: #{mlp_forward.1} parent=1 // pred_region
      %s451 = ssub.s32 128, 128
      %452 = vsyncadd [#allocation4], %s451
      %s454 = sshll.u32 [#allocation8], 4
      %s455 = int_to_ptr.vmem [resolvable:$true] %s454
      %457 = dma.vmem_to_hbm [thread:$0]  %s455, 128, %s5, [#allocation4]
    $region37: #{mlp_forward.1} parent=1 // pred_fallthru
      _
    // Predicated region
    $region38: #{mlp_forward.1} parent=1 // pred_check
      _
    $region39: #{mlp_forward.1} parent=1 // pred_check_branch
      %459 = sbr.rel (0) target = $region41
    $region40: #{mlp_forward.1} parent=1 // pred_region
      %460 = dma.done [#allocation4], 128
    $region41: #{mlp_forward.1} parent=1 // pred_fallthru
      _
    %461 = vsyncpa [#allocation3], 1
    %462 = vsyncpa [#allocation6], 1
    %463 = vsyncpa [#allocation4], 1

</llo_original>
